<compile_context>
chip_gen: v5e
topology: v5e:2x2
jax: 0.10.0
libtpu: 0.0.40
codegen_flags: <defaults>
</compile_context>

<pallas_src>
import jax
import jax.numpy as jnp
from jax.experimental import pallas as pl
from jax.experimental.pallas import tpu as pltpu

HIDDEN = 800                      # nn.Linear(input_size, 800)

_H_ALIGN = 128                    # lane-dense hidden padding (800 -> 896)
_KTILE = 2048                     # K tile for the (rare) huge-input fallback
_RESIDENT_W_BYTES = 24 << 20      # bf16 weight budget for the resident path
_SINGLE_BUF_W_BYTES = 4 << 20     # single-buffer the weight only when it is big
_VMEM_BUDGET = 44 << 20           # total working-set target (safe on v7x 64 MiB)


def _pad_to(n: int, m: int) -> int:
    return ((n + m - 1) // m) * m


def _padded_input_dim(input_size: int, h_pad: int) -> int:
    d128 = _pad_to(input_size, 128)
    if d128 * h_pad * 2 <= _RESIDENT_W_BYTES:
        return d128                       # resident-weight path
    return _pad_to(input_size, _KTILE)    # K-tiled path


# ---------------------------------------------------------------------------
# Kernels
# ---------------------------------------------------------------------------

def _linear_relu_resident_kernel(x_ref, w_ref, b_ref, o_ref):
    # x_ref: (TM, D_pad) f32   w_ref: (D_pad, H_pad) bf16 (VMEM-resident)
    # b_ref: (1, H_pad) f32    o_ref: (TM, H_pad) f32
    xb = x_ref[...].astype(jnp.bfloat16)          # VPU cast, hidden under MXU
    y = jnp.dot(xb, w_ref[...], preferred_element_type=jnp.float32) + b_ref[...]
    o_ref[...] = jnp.maximum(y, 0.0).astype(o_ref.dtype)


def _linear_relu_ktiled_kernel(x_ref, w_ref, b_ref, o_ref):
    # x_ref: (TM, TK) f32   w_ref: (TK, H_pad) bf16   b_ref: (1, H_pad) f32
    # o_ref: (TM, H_pad) f32 -- resident across k, used directly as accumulator.
    k = pl.program_id(1)
    part = jnp.dot(x_ref[...].astype(jnp.bfloat16), w_ref[...],
                   preferred_element_type=jnp.float32)

    @pl.when(k == 0)
    def _():
        o_ref[...] = part            # no zero-init round trip

    @pl.when(k > 0)
    def _():
        o_ref[...] += part

    @pl.when(k == pl.num_programs(1) - 1)
    def _():
        o_ref[...] = jnp.maximum(o_ref[...] + b_ref[...], 0.0)


# ---------------------------------------------------------------------------
# Parameter packing (done ONCE at init -- hoisted out of the forward pass)
# ---------------------------------------------------------------------------

def init_encoder_params(key, input_size, hidden=HIDDEN):
    """Deterministic init mimicking nn.Linear: W (hidden, input), b (hidden,)."""
    kw, kb = jax.random.split(key)
    bound = 1.0 / jnp.sqrt(jnp.float32(input_size))
    w = jax.random.uniform(kw, (hidden, input_size), jnp.float32, -bound, bound)
    b = jax.random.uniform(kb, (hidden,), jnp.float32, -bound, bound)
    return w, b


def pack_params(w, b):
    """Torch-layout (H, D) f32 weight + (H,) bias -> padded bf16 (D_pad, H_pad)
    transposed weight and f32 (1, H_pad) bias, ready for the kernel."""
    hidden, d = w.shape
    h_pad = _pad_to(hidden, _H_ALIGN)
    d_pad = _padded_input_dim(d, h_pad)
    w_p = jnp.pad(w.T, ((0, d_pad - d), (0, h_pad - hidden))).astype(jnp.bfloat16)
    b_p = jnp.pad(b.reshape(1, -1).astype(jnp.float32),
                  ((0, 0), (0, h_pad - hidden)))
    return w_p, b_p


# ---------------------------------------------------------------------------
# Forward
# ---------------------------------------------------------------------------

def encoder_forward(x, w_p, b_p, hidden=HIDDEN, *, force_ktile=None):
    """x: (B, D) f32, w_p: (D_pad, H_pad) bf16, b_p: (1, H_pad) f32 -> (B, hidden) f32."""
    B, D = x.shape
    D_pad, H_pad = w_p.shape
    assert D <= D_pad and b_p.shape == (1, H_pad)
    assert D_pad % 128 == 0 and H_pad % 128 == 0

    w_bytes = D_pad * H_pad * 2
    resident = (force_ktile is None) and (w_bytes <= _RESIDENT_W_BYTES)
    single_buf_w = resident and (w_bytes > _SINGLE_BUF_W_BYTES)
    w_buf_bytes = w_bytes * (1 if single_buf_w else 2)

    # ---- batch tile ---------------------------------------------------------
    if B <= 128:
        TM = max(8, _pad_to(B, 8))
    elif resident:
        TM = 128
        for cand in (512, 256, 128):
            need = w_buf_bytes + 2 * cand * D_pad * 4 + 2 * cand * H_pad * 4
            if cand <= B and need <= _VMEM_BUDGET:
                TM = cand
                break
    else:
        TM = 512 if B >= 512 else 256
    B_pad = _pad_to(B, TM)
    nb = B_pad // TM

    # ---- pad x only (stays f32; bf16 cast happens on the VPU in-kernel) -----
    if (B_pad, D_pad) != (B, D):
        x = jnp.pad(x, ((0, B_pad - B), (0, D_pad - D)))

    bias_bytes = 2 * H_pad * 4

    if resident:
        grid = (nb,)
        if single_buf_w:
            # Constant-index block: DMA'd once, keep it single-buffered so the
            # large weight does not double its VMEM footprint (v7x: 64 MiB).
            w_spec = pl.BlockSpec((D_pad, H_pad), lambda i: (0, 0),
                                  pipeline_mode=pl.Buffered(1))
        else:
            w_spec = pl.BlockSpec((D_pad, H_pad), lambda i: (0, 0))
        in_specs = [
            pl.BlockSpec((TM, D_pad), lambda i: (i, 0)),        # x tile (f32)
            w_spec,                                             # resident weight
            pl.BlockSpec((1, H_pad), lambda i: (0, 0)),         # bias
        ]
        out_specs = pl.BlockSpec((TM, H_pad), lambda i: (i, 0))
        kernel = _linear_relu_resident_kernel
        dims = ("parallel",)
        vmem_need = (w_buf_bytes
                     + 2 * TM * D_pad * 4          # x double-buffer (f32)
                     + 2 * TM * H_pad * 4          # out double-buffer (f32)
                     + bias_bytes)
    else:
        TK = force_ktile if force_ktile is not None else _KTILE
        assert D_pad % TK == 0
        nk = D_pad // TK
        grid = (nb, nk)                            # reduction axis last
        in_specs = [
            pl.BlockSpec((TM, TK), lambda i, k: (i, k)),        # x tile (f32)
            pl.BlockSpec((TK, H_pad), lambda i, k: (k, 0)),     # weight tile
            pl.BlockSpec((1, H_pad), lambda i, k: (0, 0)),      # bias
        ]
        out_specs = pl.BlockSpec((TM, H_pad), lambda i, k: (i, 0))
        kernel = _linear_relu_ktiled_kernel
        dims = ("parallel", "arbitrary")
        vmem_need = (2 * TK * H_pad * 2
                     + 2 * TM * TK * 4
                     + 2 * TM * H_pad * 4
                     + bias_bytes)

    cost = pl.CostEstimate(
        flops=2 * B_pad * D_pad * H_pad,
        transcendentals=0,
        bytes_accessed=int(x.nbytes + w_p.nbytes + b_p.nbytes
                           + B_pad * H_pad * 4),
    )

    out_padded = pl.pallas_call(
        kernel,
        out_shape=jax.ShapeDtypeStruct((B_pad, H_pad), jnp.float32),
        grid_spec=pltpu.PrefetchScalarGridSpec(
            num_scalar_prefetch=0,
            grid=grid,
            in_specs=in_specs,
            out_specs=out_specs,
        ),
        compiler_params=pltpu.CompilerParams(
            dimension_semantics=dims,
            vmem_limit_bytes=int(min(max(vmem_need + (8 << 20), 32 << 20),
                                     96 << 20)),
        ),
        cost_estimate=cost,
    )(x, w_p, b_p)

    # Drop batch / hidden padding.
    return out_padded[:B, :hidden]


# ---------------------------------------------------------------------------
# Self-test
# ---------------------------------------------------------------------------

if __name__ == "__main__":
    key = jax.random.PRNGKey(0)
    k_x, k_p, k_x2, k_p2 = jax.random.split(key, 4)

    # Case 1: small batch / small input_size -> resident-weight one-shot path.
    batch, input_size = 2, 32
    x = jax.random.normal(k_x, (batch, input_size), dtype=jnp.float32)
    w, b = init_encoder_params(k_p, input_size)
    w_p, b_p = pack_params(w, b)                       # pad/cast hoisted to init
    out = jax.block_until_ready(encoder_forward(x, w_p, b_p))
    ref = jnp.maximum(x @ w.T + b, 0.0)                # PyTorch Linear + ReLU
    assert out.shape == (batch, HIDDEN)
    assert jnp.allclose(out, ref, atol=2e-2, rtol=2e-2), (
        float(jnp.max(jnp.abs(out - ref))))

    # Case 2: exercise the K-tiled accumulation path (forced small K tile).
    batch2, input_size2 = 4, 256
    x2 = jax.random.normal(k_x2, (batch2, input_size2), dtype=jnp.float32)
    w2, b2 = init_encoder_params(k_p2, input_size2)
    w2_p, b2_p = pack_params(w2, b2)
    out2 = jax.block_until_ready(
        encoder_forward(x2, w2_p, b2_p, force_ktile=128))
    ref2 = jnp.maximum(x2 @ w2.T + b2, 0.0)
    assert out2.shape == (batch2, HIDDEN)
    assert jnp.allclose(out2, ref2, atol=2e-2, rtol=2e-2), (
        float(jnp.max(jnp.abs(out2 - ref2))))

    print("KERNEL_OK")
</pallas_src>

<mosaic_0001>
module attributes {stable_mosaic.version = 11 : i64} {
  func.func @_linear_relu_resident_kernel(%arg0: i32, %arg1: memref<8x128xf32, #tpu.memory_space<vmem>>, %arg2: memref<128x896xbf16, #tpu.memory_space<vmem>>, %arg3: memref<1x896xf32, #tpu.memory_space<vmem>>, %arg4: memref<8x896xf32, #tpu.memory_space<vmem>>) attributes {dimension_semantics = [#tpu.dimension_semantics<parallel>], iteration_bounds = array<i64: 1>, scalar_prefetch = 0 : i64, scratch_operands = 0 : i64, tpu.core_type = #tpu.core_type<tc>, window_params = [{transform_indices = @transform_0, window_bounds = array<i64: 8, 128>}, {pipeline_mode = #tpu.pipeline_mode<synchronous>, transform_indices = @transform_1, window_bounds = array<i64: 128, 896>}, {pipeline_mode = #tpu.pipeline_mode<synchronous>, transform_indices = @transform_2, window_bounds = array<i64: 1, 896>}, {transform_indices = @transform_3, window_bounds = array<i64: 8, 896>}]} {
    %c0 = arith.constant 0 : index
    %c0_0 = arith.constant 0 : index
    %0 = vector.load %arg1[%c0, %c0_0] : memref<8x128xf32, #tpu.memory_space<vmem>>, vector<8x128xf32>
    %1 = arith.truncf %0 : vector<8x128xf32> to vector<8x128xbf16>
    %c0_1 = arith.constant 0 : index
    %c0_2 = arith.constant 0 : index
    %2 = vector.load %arg2[%c0_1, %c0_2] : memref<128x896xbf16, #tpu.memory_space<vmem>>, vector<128x896xbf16>
    %cst = arith.constant dense<0.000000e+00> : vector<8x896xf32>
    %3 = tpu.matmul %1, %2, %cst {dimension_numbers = #tpu.dot_dimension_numbers<[1], [0], [0], [1], [0, 0, 1, 1], [], []>} : vector<8x128xbf16>, vector<128x896xbf16>, vector<8x896xf32> -> vector<8x896xf32>
    %c0_3 = arith.constant 0 : index
    %c0_4 = arith.constant 0 : index
    %4 = vector.load %arg3[%c0_3, %c0_4] : memref<1x896xf32, #tpu.memory_space<vmem>>, vector<1x896xf32>
    %5 = vector.broadcast %4 : vector<1x896xf32> to vector<8x896xf32>
    %6 = arith.addf %3, %5 : vector<8x896xf32>
    %cst_5 = arith.constant 0.000000e+00 : f32
    %7 = vector.broadcast %cst_5 : f32 to vector<8x896xf32>
    %8 = arith.maximumf %6, %7 : vector<8x896xf32>
    %c0_6 = arith.constant 0 : index
    %c0_7 = arith.constant 0 : index
    %9 = vector.load %arg4[%c0_6, %c0_7] : memref<8x896xf32, #tpu.memory_space<vmem>>, vector<8x896xf32>
    tpu.vector_store %arg4[%c0_6, %c0_7], %8 {strides = array<i32>} : memref<8x896xf32, #tpu.memory_space<vmem>>, vector<8x896xf32>,
    return
  }
  func.func @transform_0(%arg0: i32) -> (i32, i32) {
    %c0_i32 = arith.constant 0 : i32
    %c0_i32_0 = arith.constant 0 : i32
    return %arg0, %c0_i32 : i32, i32
  }
  func.func @transform_1(%arg0: i32) -> (i32, i32) {
    %c0_i32 = arith.constant 0 : i32
    %c0_i32_0 = arith.constant 0 : i32
    %c0_i32_1 = arith.constant 0 : i32
    return %c0_i32, %c0_i32_0 : i32, i32
  }
  func.func @transform_2(%arg0: i32) -> (i32, i32) {
    %c0_i32 = arith.constant 0 : i32
    %c0_i32_0 = arith.constant 0 : i32
    %c0_i32_1 = arith.constant 0 : i32
    return %c0_i32, %c0_i32_0 : i32, i32
  }
  func.func @transform_3(%arg0: i32) -> (i32, i32) {
    %c0_i32 = arith.constant 0 : i32
    %c0_i32_0 = arith.constant 0 : i32
    return %arg0, %c0_i32 : i32, i32
  }
}

</mosaic_0001>

<llo_original>
// kernel: tpu_custom_call.1
$region0: #{tpu_custom_call.1}
  #allocation0 [shape = 'u32[]', space=smem, size = 0x4, offset = 0x4, fixed_abs, tag = 'smem constant byte address 0x4 - core index']
  #allocation1 [shape = 'u32[72,128]{1,0:T(1,128)}', space=vmem, size = 0x9000, scoped, tag = 'internal scratch']
  %s0 = inlined_call_operand.hbm [shape: f32[8,128], index: 0, kind: input, shape index: {}]
  %s1 = inlined_call_operand.hbm [shape: bf16[128,896], index: 1, kind: input, shape index: {}]
  %s2 = inlined_call_operand.hbm [shape: f32[1,896], index: 2, kind: input, shape index: {}]
  %s3 = inlined_call_operand.hbm [shape: f32[8,896], index: 3, kind: output, shape index: {}]
  %s4 = sld [smem:[#allocation0]]
  $region34: #{tpu_custom_call.1} parent=0
    _
  %s6 = ssub.s32 1, %s4
  %s7 = scalar_select 0, %s6, %s4
  $region1: #{tpu_custom_call.1} parent=0
    #allocation2 [shape = 'u8[4096]{0}', space=vmem, size = 0x1000, scoped, tag = 'input window, operand 0, single buffered']
    #allocation3 [shape = 's32[1]{0}', space=sflag, size = 0x4, scoped, tag = 'scoped memory for tpu_custom_call.1']
    #allocation4 [shape = 's32[1]{0}', space=sflag, size = 0x4, scoped, tag = 'scoped memory for tpu_custom_call.1']
    #allocation5 [shape = 'u8[229376]{0}', space=vmem, size = 0x38000, scoped, tag = 'input window, operand 1, single buffered']
    #allocation6 [shape = 's32[1]{0}', space=sflag, size = 0x4, scoped, tag = 'scoped memory for tpu_custom_call.1']
    #allocation7 [shape = 'u8[3584]{0}', space=vmem, size = 0x1000, scoped, tag = 'input window, operand 2, single buffered']
    #allocation8 [shape = 'u8[28672]{0}', space=vmem, size = 0x7000, scoped, tag = 'output window, operand 0, single buffered']
    %8 = vsyncpa [#allocation3], 0
    %9 = vsyncpa [#allocation6], 0
    %10 = vsyncpa [#allocation4], 0
    // Predicated region
    $region2: #{tpu_custom_call.1} parent=1 // pred_check
      _
    $region3: #{tpu_custom_call.1} parent=1 // pred_check_branch
      %12 = sbr.rel (0) target = $region5
    $region4: #{tpu_custom_call.1} parent=1 // pred_region
      %14 = vsyncadd [#allocation3], 0
      %s16 = sshll.u32 %s0, 4
      %s17 = int_to_ptr.hbm [resolvable:$true] %s16
      %s18 = sshll.u32 [#allocation2], 4
      %s19 = int_to_ptr.vmem [resolvable:$true] %s18
      %21 = dma.hbm_to_vmem [thread:$0]  %s17, 128, %s19, [#allocation3]
    $region5: #{tpu_custom_call.1} parent=1 // pred_fallthru
      _
    // Predicated region
    $region6: #{tpu_custom_call.1} parent=1 // pred_check
      _
    $region7: #{tpu_custom_call.1} parent=1 // pred_check_branch
      %23 = sbr.rel (0) target = $region9
    $region8: #{tpu_custom_call.1} parent=1 // pred_region
      %25 = vsyncadd [#allocation6], 0
      %s26 = sshll.u32 %s1, 4
      %s27 = int_to_ptr.hbm [resolvable:$true] %s26
      %s28 = sshll.u32 [#allocation5], 4
      %s29 = int_to_ptr.vmem [resolvable:$true] %s28
      %34 = dma.hbm_to_vmem [thread:$0]  %s27, 7168, %s29, [#allocation6], 448, 448, 28
    $region9: #{tpu_custom_call.1} parent=1 // pred_fallthru
      _
    // Predicated region
    $region10: #{tpu_custom_call.1} parent=1 // pred_check
      _
    $region11: #{tpu_custom_call.1} parent=1 // pred_check_branch
      %36 = sbr.rel (0) target = $region13
    $region12: #{tpu_custom_call.1} parent=1 // pred_region
      %38 = vsyncadd [#allocation6], 0
      %s40 = sshll.u32 %s2, 4
      %s41 = int_to_ptr.hbm [resolvable:$true] %s40
      %s42 = sshll.u32 [#allocation7], 4
      %s43 = int_to_ptr.vmem [resolvable:$true] %s42
      %45 = dma.hbm_to_vmem [thread:$0]  %s41, 112, %s43, [#allocation6]
    $region13: #{tpu_custom_call.1} parent=1 // pred_fallthru
      _
    // Predicated region
    $region14: #{tpu_custom_call.1} parent=1 // pred_check
      _
    $region15: #{tpu_custom_call.1} parent=1 // pred_check_branch
      %47 = sbr.rel (0) target = $region17
    $region16: #{tpu_custom_call.1} parent=1 // pred_region
      %49 = dma.done [#allocation3], 128
    $region17: #{tpu_custom_call.1} parent=1 // pred_fallthru
      _
    // Predicated region
    $region18: #{tpu_custom_call.1} parent=1 // pred_check
      _
    $region19: #{tpu_custom_call.1} parent=1 // pred_check_branch
      %51 = sbr.rel (0) target = $region21
    $region20: #{tpu_custom_call.1} parent=1 // pred_region
      %53 = dma.done [#allocation6], 7168
    $region21: #{tpu_custom_call.1} parent=1 // pred_fallthru
      _
    // Predicated region
    $region22: #{tpu_custom_call.1} parent=1 // pred_check
      _
    $region23: #{tpu_custom_call.1} parent=1 // pred_check_branch
      %55 = sbr.rel (0) target = $region25
    $region24: #{tpu_custom_call.1} parent=1 // pred_region
      %57 = dma.done [#allocation6], 112
    $region25: #{tpu_custom_call.1} parent=1 // pred_fallthru
      _
    %v58 = vld [vmem:[#allocation2] sm:$0xff]
    %v59 = vpack.c.bf16 %v58, %v58
    %v60 = vld [vmem:[#allocation5] sm:$0xff]
    %v61 = vld [vmem:[#allocation5 + $0x8] sm:$0xff]
    %v62 = vld [vmem:[#allocation5 + $0x10] sm:$0xff]
    %v63 = vld [vmem:[#allocation5 + $0x18] sm:$0xf]
    %v64 = vld [vmem:[#allocation5 + $0x1c] sm:$0xff]
    %v65 = vld [vmem:[#allocation5 + $0x24] sm:$0xff]
    %v66 = vld [vmem:[#allocation5 + $0x2c] sm:$0xff]
    %v67 = vld [vmem:[#allocation5 + $0x34] sm:$0xf]
    %v68 = vld [vmem:[#allocation5 + $0x38] sm:$0xff]
    %v69 = vld [vmem:[#allocation5 + $0x40] sm:$0xff]
    %v70 = vld [vmem:[#allocation5 + $0x48] sm:$0xff]
    %v71 = vld [vmem:[#allocation5 + $0x50] sm:$0xf]
    %v72 = vld [vmem:[#allocation5 + $0x54] sm:$0xff]
    %v73 = vld [vmem:[#allocation5 + $0x5c] sm:$0xff]
    %v74 = vld [vmem:[#allocation5 + $0x64] sm:$0xff]
    %v75 = vld [vmem:[#allocation5 + $0x6c] sm:$0xf]
    %v76 = vld [vmem:[#allocation5 + $0x70] sm:$0xff]
    %v77 = vld [vmem:[#allocation5 + $0x78] sm:$0xff]
    %v78 = vld [vmem:[#allocation5 + $0x80] sm:$0xff]
    %v79 = vld [vmem:[#allocation5 + $0x88] sm:$0xf]
    %v80 = vld [vmem:[#allocation5 + $0x8c] sm:$0xff]
    %v81 = vld [vmem:[#allocation5 + $0x94] sm:$0xff]
    %v82 = vld [vmem:[#allocation5 + $0x9c] sm:$0xff]
    %v83 = vld [vmem:[#allocation5 + $0xa4] sm:$0xf]
    %v84 = vld [vmem:[#allocation5 + $0xa8] sm:$0xff]
    %v85 = vld [vmem:[#allocation5 + $0xb0] sm:$0xff]
    %v86 = vld [vmem:[#allocation5 + $0xb8] sm:$0xff]
    %v87 = vld [vmem:[#allocation5 + $0xc0] sm:$0xf]
    %v88 = vld [vmem:[#allocation5 + $0xc4] sm:$0xff]
    %v89 = vld [vmem:[#allocation5 + $0xcc] sm:$0xff]
    %v90 = vld [vmem:[#allocation5 + $0xd4] sm:$0xff]
    %v91 = vld [vmem:[#allocation5 + $0xdc] sm:$0xf]
    %v92 = vld [vmem:[#allocation5 + $0xe0] sm:$0xff]
    %v93 = vld [vmem:[#allocation5 + $0xe8] sm:$0xff]
    %v94 = vld [vmem:[#allocation5 + $0xf0] sm:$0xff]
    %v95 = vld [vmem:[#allocation5 + $0xf8] sm:$0xf]
    %v96 = vld [vmem:[#allocation5 + $0xfc] sm:$0xff]
    %v97 = vld [vmem:[#allocation5 + $0x104] sm:$0xff]
    %v98 = vld [vmem:[#allocation5 + $0x10c] sm:$0xff]
    %v99 = vld [vmem:[#allocation5 + $0x114] sm:$0xf]
    %v100 = vld [vmem:[#allocation5 + $0x118] sm:$0xff]
    %v101 = vld [vmem:[#allocation5 + $0x120] sm:$0xff]
    %v102 = vld [vmem:[#allocation5 + $0x128] sm:$0xff]
    %v103 = vld [vmem:[#allocation5 + $0x130] sm:$0xf]
    %v104 = vld [vmem:[#allocation5 + $0x134] sm:$0xff]
    %v105 = vld [vmem:[#allocation5 + $0x13c] sm:$0xff]
    %v106 = vld [vmem:[#allocation5 + $0x144] sm:$0xff]
    %v107 = vld [vmem:[#allocation5 + $0x14c] sm:$0xf]
    %v108 = vld [vmem:[#allocation5 + $0x150] sm:$0xff]
    %v109 = vld [vmem:[#allocation5 + $0x158] sm:$0xff]
    %v110 = vld [vmem:[#allocation5 + $0x160] sm:$0xff]
    %v111 = vld [vmem:[#allocation5 + $0x168] sm:$0xf]
    %v112 = vld [vmem:[#allocation5 + $0x16c] sm:$0xff]
    %v113 = vld [vmem:[#allocation5 + $0x174] sm:$0xff]
    %v114 = vld [vmem:[#allocation5 + $0x17c] sm:$0xff]
    %v115 = vld [vmem:[#allocation5 + $0x184] sm:$0xf]
    %v116 = vld [vmem:[#allocation5 + $0x188] sm:$0xff]
    %v117 = vld [vmem:[#allocation5 + $0x190] sm:$0xff]
    %v118 = vld [vmem:[#allocation5 + $0x198] sm:$0xff]
    %v119 = vld [vmem:[#allocation5 + $0x1a0] sm:$0xf]
    %v120 = vld [vmem:[#allocation5 + $0x1a4] sm:$0xff]
    %v121 = vld [vmem:[#allocation5 + $0x1ac] sm:$0xff]
    %v122 = vld [vmem:[#allocation5 + $0x1b4] sm:$0xff]
    %v123 = vld [vmem:[#allocation5 + $0x1bc] sm:$0xf]
    %v124 = vld [vmem:[#allocation7] sm:$0xff]
    %v126 = vperm.slane %v124, 0
    %v127 = vperm.slane %v124, 1
    %v128 = vperm.slane %v124, 2
    %v129 = vperm.slane %v124, 3
    %v130 = vperm.slane %v124, 4
    %v131 = vperm.slane %v124, 5
    %v132 = vperm.slane %v124, 6
    %v204 = vunpack.c.l.b16 %v60
    %v205 = vunpack.c.h.b16 %v60
    %v206 = vunpack.c.l.b16 %v61
    %v207 = vunpack.c.h.b16 %v61
    %v208 = vunpack.c.l.b16 %v62
    %v209 = vunpack.c.h.b16 %v62
    %v210 = vunpack.c.l.b16 %v63
    %v211 = vunpack.c.l.b16 %v64
    %v212 = vunpack.c.h.b16 %v64
    %v213 = vunpack.c.l.b16 %v65
    %v214 = vunpack.c.h.b16 %v65
    %v215 = vunpack.c.l.b16 %v66
    %v216 = vunpack.c.h.b16 %v66
    %v217 = vunpack.c.l.b16 %v67
    %v218 = vunpack.c.l.b16 %v68
    %v219 = vunpack.c.h.b16 %v68
    %v220 = vunpack.c.l.b16 %v69
    %v221 = vunpack.c.h.b16 %v69
    %v222 = vunpack.c.l.b16 %v70
    %v223 = vunpack.c.h.b16 %v70
    %v224 = vunpack.c.l.b16 %v71
    %v225 = vunpack.c.l.b16 %v72
    %v226 = vunpack.c.h.b16 %v72
    %v227 = vunpack.c.l.b16 %v73
    %v228 = vunpack.c.h.b16 %v73
    %v229 = vunpack.c.l.b16 %v74
    %v230 = vunpack.c.h.b16 %v74
    %v231 = vunpack.c.l.b16 %v75
    %v232 = vunpack.c.l.b16 %v76
    %v233 = vunpack.c.h.b16 %v76
    %v234 = vunpack.c.l.b16 %v77
    %v235 = vunpack.c.h.b16 %v77
    %v236 = vunpack.c.l.b16 %v78
    %v237 = vunpack.c.h.b16 %v78
    %v238 = vunpack.c.l.b16 %v79
    %v239 = vunpack.c.l.b16 %v80
    %v240 = vunpack.c.h.b16 %v80
    %v241 = vunpack.c.l.b16 %v81
    %v242 = vunpack.c.h.b16 %v81
    %v243 = vunpack.c.l.b16 %v82
    %v244 = vunpack.c.h.b16 %v82
    %v245 = vunpack.c.l.b16 %v83
    %v246 = vunpack.c.l.b16 %v84
    %v247 = vunpack.c.h.b16 %v84
    %v248 = vunpack.c.l.b16 %v85
    %v249 = vunpack.c.h.b16 %v85
    %v250 = vunpack.c.l.b16 %v86
    %v251 = vunpack.c.h.b16 %v86
    %v252 = vunpack.c.l.b16 %v87
    %v253 = vunpack.c.l.b16 %v88
    %v254 = vunpack.c.h.b16 %v88
    %v255 = vunpack.c.l.b16 %v89
    %v256 = vunpack.c.h.b16 %v89
    %v257 = vunpack.c.l.b16 %v90
    %v258 = vunpack.c.h.b16 %v90
    %v259 = vunpack.c.l.b16 %v91
    %v260 = vunpack.c.l.b16 %v92
    %v261 = vunpack.c.h.b16 %v92
    %v262 = vunpack.c.l.b16 %v93
    %v263 = vunpack.c.h.b16 %v93
    %v264 = vunpack.c.l.b16 %v94
    %v265 = vunpack.c.h.b16 %v94
    %v266 = vunpack.c.l.b16 %v95
    %v267 = vunpack.c.l.b16 %v96
    %v268 = vunpack.c.h.b16 %v96
    %v269 = vunpack.c.l.b16 %v97
    %v270 = vunpack.c.h.b16 %v97
    %v271 = vunpack.c.l.b16 %v98
    %v272 = vunpack.c.h.b16 %v98
    %v273 = vunpack.c.l.b16 %v99
    %v274 = vunpack.c.l.b16 %v100
    %v275 = vunpack.c.h.b16 %v100
    %v276 = vunpack.c.l.b16 %v101
    %v277 = vunpack.c.h.b16 %v101
    %v278 = vunpack.c.l.b16 %v102
    %v279 = vunpack.c.h.b16 %v102
    %v280 = vunpack.c.l.b16 %v103
    %v281 = vunpack.c.l.b16 %v104
    %v282 = vunpack.c.h.b16 %v104
    %v283 = vunpack.c.l.b16 %v105
    %v284 = vunpack.c.h.b16 %v105
    %v285 = vunpack.c.l.b16 %v106
    %v286 = vunpack.c.h.b16 %v106
    %v287 = vunpack.c.l.b16 %v107
    %v288 = vunpack.c.l.b16 %v108
    %v289 = vunpack.c.h.b16 %v108
    %v290 = vunpack.c.l.b16 %v109
    %v291 = vunpack.c.h.b16 %v109
    %v292 = vunpack.c.l.b16 %v110
    %v293 = vunpack.c.h.b16 %v110
    %v294 = vunpack.c.l.b16 %v111
    %v295 = vunpack.c.l.b16 %v112
    %v296 = vunpack.c.h.b16 %v112
    %v297 = vunpack.c.l.b16 %v113
    %v298 = vunpack.c.h.b16 %v113
    %v299 = vunpack.c.l.b16 %v114
    %v300 = vunpack.c.h.b16 %v114
    %v301 = vunpack.c.l.b16 %v115
    %v302 = vunpack.c.l.b16 %v116
    %v303 = vunpack.c.h.b16 %v116
    %v304 = vunpack.c.l.b16 %v117
    %v305 = vunpack.c.h.b16 %v117
    %v306 = vunpack.c.l.b16 %v118
    %v307 = vunpack.c.h.b16 %v118
    %v308 = vunpack.c.l.b16 %v119
    %v309 = vunpack.c.l.b16 %v120
    %v310 = vunpack.c.h.b16 %v120
    %v311 = vunpack.c.l.b16 %v121
    %v312 = vunpack.c.h.b16 %v121
    %v313 = vunpack.c.l.b16 %v122
    %v314 = vunpack.c.h.b16 %v122
    %v315 = vunpack.c.l.b16 %v123
    %v316 = vpack.c.b16 %v211, %v204
    %v317 = vpack.c.b16 %v212, %v205
    %v318 = vpack.c.b16 %v213, %v206
    %v319 = vpack.c.b16 %v214, %v207
    %v320 = vpack.c.b16 %v215, %v208
    %v321 = vpack.c.b16 %v216, %v209
    %v322 = vpack.c.b16 %v217, %v210
    %v323 = vpack.c.b16 %v225, %v218
    %v324 = vpack.c.b16 %v226, %v219
    %v325 = vpack.c.b16 %v227, %v220
    %v326 = vpack.c.b16 %v228, %v221
    %v327 = vpack.c.b16 %v229, %v222
    %v328 = vpack.c.b16 %v230, %v223
    %v329 = vpack.c.b16 %v231, %v224
    %v330 = vpack.c.b16 %v239, %v232
    %v331 = vpack.c.b16 %v240, %v233
    %v332 = vpack.c.b16 %v241, %v234
    %v333 = vpack.c.b16 %v242, %v235
    %v334 = vpack.c.b16 %v243, %v236
    %v335 = vpack.c.b16 %v244, %v237
    %v336 = vpack.c.b16 %v245, %v238
    %v337 = vpack.c.b16 %v253, %v246
    %v338 = vpack.c.b16 %v254, %v247
    %v339 = vpack.c.b16 %v255, %v248
    %v340 = vpack.c.b16 %v256, %v249
    %v341 = vpack.c.b16 %v257, %v250
    %v342 = vpack.c.b16 %v258, %v251
    %v343 = vpack.c.b16 %v259, %v252
    %v344 = vpack.c.b16 %v267, %v260
    %v345 = vpack.c.b16 %v268, %v261
    %v346 = vpack.c.b16 %v269, %v262
    %v347 = vpack.c.b16 %v270, %v263
    %v348 = vpack.c.b16 %v271, %v264
    %v349 = vpack.c.b16 %v272, %v265
    %v350 = vpack.c.b16 %v273, %v266
    %v351 = vpack.c.b16 %v281, %v274
    %v352 = vpack.c.b16 %v282, %v275
    %v353 = vpack.c.b16 %v283, %v276
    %v354 = vpack.c.b16 %v284, %v277
    %v355 = vpack.c.b16 %v285, %v278
    %v356 = vpack.c.b16 %v286, %v279
    %v357 = vpack.c.b16 %v287, %v280
    %v358 = vpack.c.b16 %v295, %v288
    %v359 = vpack.c.b16 %v296, %v289
    %v360 = vpack.c.b16 %v297, %v290
    %v361 = vpack.c.b16 %v298, %v291
    %v362 = vpack.c.b16 %v299, %v292
    %v363 = vpack.c.b16 %v300, %v293
    %v364 = vpack.c.b16 %v301, %v294
    %v365 = vpack.c.b16 %v309, %v302
    %v366 = vpack.c.b16 %v310, %v303
    %v367 = vpack.c.b16 %v311, %v304
    %v368 = vpack.c.b16 %v312, %v305
    %v369 = vpack.c.b16 %v313, %v306
    %v370 = vpack.c.b16 %v314, %v307
    %v371 = vpack.c.b16 %v315, %v308
    %428 = vmatpush.bf16.msra.mxu0 %v365
    %429 = vmatpush.bf16.msra.mxu0 %v358
    %430 = vmatpush.bf16.msra.mxu0 %v351
    %431 = vmatpush.bf16.msra.mxu0 %v344
    %432 = vmatpush.bf16.msra.mxu0 %v337
    %433 = vmatpush.bf16.msra.mxu0 %v330
    %434 = vmatpush.bf16.msra.mxu0 %v323
    %435 = vmatpush.bf16.msra.mxu0 %v316
    %436 = vmatmul.bf16.gmra.mxu0 %v59
    %v437 = vpop.f32.mrf.mxu0
    %v438 = vadd.f32 %v126, %v437
    %v439 = vpop.f32.mrf.mxu0
    %440 = vdwg.mxu0
    %441 = vmatpush.bf16.msra.mxu0 %v366
    %442 = vmatpush.bf16.msra.mxu0 %v359
    %443 = vmatpush.bf16.msra.mxu0 %v352
    %444 = vmatpush.bf16.msra.mxu0 %v345
    %445 = vmatpush.bf16.msra.mxu0 %v338
    %446 = vmatpush.bf16.msra.mxu0 %v331
    %447 = vmatpush.bf16.msra.mxu0 %v324
    %448 = vmatpush.bf16.msra.mxu0 %v317
    %449 = vmatmul.bf16.gmra.mxu0 %v59
    %v450 = vpop.f32.mrf.mxu0
    %v451 = vadd.f32 %v127, %v450
    %v452 = vpop.f32.mrf.mxu0
    %453 = vdwg.mxu0
    %454 = vmatpush.bf16.msra.mxu0 %v367
    %455 = vmatpush.bf16.msra.mxu0 %v360
    %456 = vmatpush.bf16.msra.mxu0 %v353
    %457 = vmatpush.bf16.msra.mxu0 %v346
    %458 = vmatpush.bf16.msra.mxu0 %v339
    %459 = vmatpush.bf16.msra.mxu0 %v332
    %460 = vmatpush.bf16.msra.mxu0 %v325
    %461 = vmatpush.bf16.msra.mxu0 %v318
    %462 = vmatmul.bf16.gmra.mxu0 %v59
    %v463 = vpop.f32.mrf.mxu0
    %v464 = vadd.f32 %v128, %v463
    %v465 = vpop.f32.mrf.mxu0
    %466 = vdwg.mxu0
    %467 = vmatpush.bf16.msra.mxu0 %v368
    %468 = vmatpush.bf16.msra.mxu0 %v361
    %469 = vmatpush.bf16.msra.mxu0 %v354
    %470 = vmatpush.bf16.msra.mxu0 %v347
    %471 = vmatpush.bf16.msra.mxu0 %v340
    %472 = vmatpush.bf16.msra.mxu0 %v333
    %473 = vmatpush.bf16.msra.mxu0 %v326
    %474 = vmatpush.bf16.msra.mxu0 %v319
    %475 = vmatmul.bf16.gmra.mxu0 %v59
    %v476 = vpop.f32.mrf.mxu0
    %v477 = vadd.f32 %v129, %v476
    %v478 = vpop.f32.mrf.mxu0
    %479 = vdwg.mxu0
    %480 = vmatpush.bf16.msra.mxu0 %v369
    %481 = vmatpush.bf16.msra.mxu0 %v362
    %482 = vmatpush.bf16.msra.mxu0 %v355
    %483 = vmatpush.bf16.msra.mxu0 %v348
    %484 = vmatpush.bf16.msra.mxu0 %v341
    %485 = vmatpush.bf16.msra.mxu0 %v334
    %486 = vmatpush.bf16.msra.mxu0 %v327
    %487 = vmatpush.bf16.msra.mxu0 %v320
    %488 = vmatmul.bf16.gmra.mxu0 %v59
    %v489 = vpop.f32.mrf.mxu0
    %v490 = vadd.f32 %v130, %v489
    %v491 = vpop.f32.mrf.mxu0
    %492 = vdwg.mxu0
    %493 = vmatpush.bf16.msra.mxu0 %v370
    %494 = vmatpush.bf16.msra.mxu0 %v363
    %495 = vmatpush.bf16.msra.mxu0 %v356
    %496 = vmatpush.bf16.msra.mxu0 %v349
    %497 = vmatpush.bf16.msra.mxu0 %v342
    %498 = vmatpush.bf16.msra.mxu0 %v335
    %499 = vmatpush.bf16.msra.mxu0 %v328
    %500 = vmatpush.bf16.msra.mxu0 %v321
    %501 = vmatmul.bf16.gmra.mxu0 %v59
    %v502 = vpop.f32.mrf.mxu0
    %v503 = vadd.f32 %v131, %v502
    %v504 = vpop.f32.mrf.mxu0
    %505 = vdwg.mxu0
    %506 = vmatpush.bf16.msra.mxu0 %v371
    %507 = vmatpush.bf16.msra.mxu0 %v364
    %508 = vmatpush.bf16.msra.mxu0 %v357
    %509 = vmatpush.bf16.msra.mxu0 %v350
    %510 = vmatpush.bf16.msra.mxu0 %v343
    %511 = vmatpush.bf16.msra.mxu0 %v336
    %512 = vmatpush.bf16.msra.mxu0 %v329
    %513 = vmatpush.bf16.msra.mxu0 %v322
    %514 = vmatmul.bf16.gmra.mxu0 %v59
    %v515 = vpop.f32.mrf.mxu0
    %v516 = vadd.f32 %v132, %v515
    %v517 = vpop.f32.mrf.mxu0
    %518 = vdwg.mxu0
    %v519 = vmax.f32 %v438, 0.0
    %v520 = vmax.f32 %v451, 0.0
    %v521 = vmax.f32 %v464, 0.0
    %v522 = vmax.f32 %v477, 0.0
    %v523 = vmax.f32 %v490, 0.0
    %v524 = vmax.f32 %v503, 0.0
    %v525 = vmax.f32 %v516, 0.0
    %526 = vst [vmem:[#allocation8] sm:$0xff] %v519
    %527 = vst [vmem:[#allocation8 + $0x8] sm:$0xff] %v520
    %528 = vst [vmem:[#allocation8 + $0x10] sm:$0xff] %v521
    %529 = vst [vmem:[#allocation8 + $0x18] sm:$0xff] %v522
    %530 = vst [vmem:[#allocation8 + $0x20] sm:$0xff] %v523
    %531 = vst [vmem:[#allocation8 + $0x28] sm:$0xff] %v524
    %532 = vst [vmem:[#allocation8 + $0x30] sm:$0xff] %v525
    // Predicated region
    $region26: #{tpu_custom_call.1} parent=1 // pred_check
      _
    $region27: #{tpu_custom_call.1} parent=1 // pred_check_branch
      %534 = sbr.rel (0) target = $region29
    $region28: #{tpu_custom_call.1} parent=1 // pred_region
      %536 = vsyncadd [#allocation4], 0
      %s538 = sshll.u32 [#allocation8], 4
      %s539 = int_to_ptr.vmem [resolvable:$true] %s538
      %s540 = sshll.u32 %s3, 4
      %s541 = int_to_ptr.hbm [resolvable:$true] %s540
      %543 = dma.vmem_to_hbm [thread:$0]  %s539, 896, %s541, [#allocation4]
    $region29: #{tpu_custom_call.1} parent=1 // pred_fallthru
      _
    // Predicated region
    $region30: #{tpu_custom_call.1} parent=1 // pred_check
      _
    $region31: #{tpu_custom_call.1} parent=1 // pred_check_branch
      %545 = sbr.rel (0) target = $region33
    $region32: #{tpu_custom_call.1} parent=1 // pred_region
      %547 = dma.done [#allocation4], 896
    $region33: #{tpu_custom_call.1} parent=1 // pred_fallthru
      _
    %548 = vsyncpa [#allocation3], 1
    %549 = vsyncpa [#allocation6], 1
    %550 = vsyncpa [#allocation4], 1

</llo_original>
